<compile_context>
chip_gen: v7x
topology: tpu7x:2x2x1
jax: 0.10.0
libtpu: 0.0.40
codegen_flags: <defaults>
</compile_context>

<pallas_src>
import jax
import jax.numpy as jnp
from jax import lax
from jax.experimental import pallas as pl
from jax.experimental.pallas import tpu as pltpu

_LANES = 128


def _w2v_resident_kernel(tgt_idx_ref, ctx_idx_ref, t_tab_ref, c_tab_ref, o_ref):
    """Tables fully resident in VMEM; rows gathered with a one-hot MXU matmul."""
    b_pad = tgt_idx_ref.shape[0]
    vocab = t_tab_ref.shape[0]

    # (B_pad, V) one-hot selectors built on the VPU.
    iota_v = lax.broadcasted_iota(jnp.int32, (b_pad, vocab), 1)
    onehot_t = (iota_v == tgt_idx_ref[...]).astype(t_tab_ref.dtype)
    onehot_c = (iota_v == ctx_idx_ref[...]).astype(c_tab_ref.dtype)

    # One vmatmul per table replaces 2*B serialized dynamic sublane reads and
    # 2*B masked single-sublane stores of the previous gather loop.
    t_g = jnp.dot(onehot_t, t_tab_ref[...], preferred_element_type=jnp.float32)
    c_g = jnp.dot(onehot_c, c_tab_ref[...], preferred_element_type=jnp.float32)

    sim = jnp.sum(t_g * c_g, axis=-1, keepdims=True)       # (B_pad, 1)  XLU
    score = jax.nn.sigmoid(sim)                             # EUP
    # Lane-dense unmasked store; wrapper takes column 0.
    o_ref[...] = jnp.broadcast_to(score, o_ref.shape)


def _w2v_hbm_gather_kernel(tgt_idx_ref, ctx_idx_ref, t_hbm_ref, c_hbm_ref, o_ref,
                           t_buf, c_buf, sems):
    """Tables stay in HBM; only 2*B rows are DMA'd (all issued before one wait pass)."""
    b_pad = t_buf.shape[0]
    small = b_pad <= 32

    def row_copies(i):
        ti = tgt_idx_ref[i]
        ci = ctx_idx_ref[i]
        t_cp = pltpu.make_async_copy(t_hbm_ref.at[pl.ds(ti, 1), :],
                                     t_buf.at[pl.ds(i, 1), :], sems.at[0, i])
        c_cp = pltpu.make_async_copy(c_hbm_ref.at[pl.ds(ci, 1), :],
                                     c_buf.at[pl.ds(i, 1), :], sems.at[1, i])
        return t_cp, c_cp

    def issue(i, carry):
        t_cp, c_cp = row_copies(i)
        t_cp.start()
        c_cp.start()
        return carry

    def wait(i, carry):
        t_cp, c_cp = row_copies(i)
        t_cp.wait()
        c_cp.wait()
        return carry

    # Issue every row DMA first, then wait: total cost ~ one DMA latency.
    lax.fori_loop(0, b_pad, issue, 0, unroll=small)
    lax.fori_loop(0, b_pad, wait, 0, unroll=small)

    t_g = t_buf[...].astype(jnp.float32)        # single cast on the full block
    c_g = c_buf[...].astype(jnp.float32)
    sim = jnp.sum(t_g * c_g, axis=-1, keepdims=True)
    score = jax.nn.sigmoid(sim)
    o_ref[...] = jnp.broadcast_to(score, o_ref.shape)


def word2vec_forward(target_emb, context_emb, target_word, context_word,
                     *, resident_table_limit_bytes=16 * 1024 * 1024,
                     force_hbm_gather=False):
    """target_emb/context_emb: (V, D); target_word/context_word: (B,) int."""
    V, D = target_emb.shape
    assert context_emb.shape == (V, D)
    B = target_word.shape[0]
    b_pad = max(8, int(pl.cdiv(B, 8)) * 8)      # fill all 8 sublanes

    # Clip indices (an OOB index would otherwise be an unchecked VMEM read or a
    # faulting HBM DMA); pad the batch (padded rows gather row 0, sliced away).
    tgt = jnp.clip(target_word.astype(jnp.int32), 0, V - 1)
    ctx = jnp.clip(context_word.astype(jnp.int32), 0, V - 1)
    tgt = jnp.pad(tgt, (0, b_pad - B))
    ctx = jnp.pad(ctx, (0, b_pad - B))

    table_bytes = 2 * V * D * target_emb.dtype.itemsize
    use_resident = (not force_hbm_gather) and table_bytes <= resident_table_limit_bytes

    out_shape = jax.ShapeDtypeStruct((b_pad, _LANES), jnp.float32)

    if use_resident:
        # No grid => single-buffered full-block inputs (nothing to pipeline);
        # size the scoped VMEM limit with 2x headroom anyway and stay well under
        # v7x's 64 MiB physical VMEM.
        vmem_limit = int(min(2 * table_bytes + (8 << 20), 60 << 20))
        out = pl.pallas_call(
            _w2v_resident_kernel,
            out_shape=out_shape,
            in_specs=[
                pl.BlockSpec(memory_space=pltpu.MemorySpace.VMEM),  # target idx (B_pad,1)
                pl.BlockSpec(memory_space=pltpu.MemorySpace.VMEM),  # context idx (B_pad,1)
                pl.BlockSpec(memory_space=pltpu.MemorySpace.VMEM),  # target table
                pl.BlockSpec(memory_space=pltpu.MemorySpace.VMEM),  # context table
            ],
            out_specs=pl.BlockSpec(memory_space=pltpu.MemorySpace.VMEM),
            compiler_params=pltpu.CompilerParams(vmem_limit_bytes=vmem_limit),
        )(tgt.reshape(b_pad, 1), ctx.reshape(b_pad, 1), target_emb, context_emb)
    else:
        # TODO(synk): for very large B, chunk the row DMAs (semaphore count is
        # 2*B_pad) and add a batch grid with dimension_semantics=("parallel",)
        # so v7x's two TensorCores split the batch.
        out = pl.pallas_call(
            _w2v_hbm_gather_kernel,
            out_shape=out_shape,
            in_specs=[
                pl.BlockSpec(memory_space=pltpu.MemorySpace.SMEM),  # target idx
                pl.BlockSpec(memory_space=pltpu.MemorySpace.SMEM),  # context idx
                pl.BlockSpec(memory_space=pl.ANY),                  # target table (HBM)
                pl.BlockSpec(memory_space=pl.ANY),                  # context table (HBM)
            ],
            out_specs=pl.BlockSpec(memory_space=pltpu.MemorySpace.VMEM),
            scratch_shapes=[
                pltpu.VMEM((b_pad, D), target_emb.dtype),
                pltpu.VMEM((b_pad, D), context_emb.dtype),
                pltpu.SemaphoreType.DMA((2, b_pad)),
            ],
        )(tgt, ctx, target_emb, context_emb)

    return out[:B, 0]


if __name__ == "__main__":
    VOCAB_SIZE = 64
    EMBEDDING_DIM = 128
    BATCH = 8

    key = jax.random.PRNGKey(0)
    k_t, k_c, k_tw, k_cw = jax.random.split(key, 4)

    # nn.Embedding weights initialized uniform_(-0.1, 0.1), deterministic here.
    target_embeddings = jax.random.uniform(
        k_t, (VOCAB_SIZE, EMBEDDING_DIM), jnp.float32, minval=-0.1, maxval=0.1)
    context_embeddings = jax.random.uniform(
        k_c, (VOCAB_SIZE, EMBEDDING_DIM), jnp.float32, minval=-0.1, maxval=0.1)

    target_word = jax.random.randint(k_tw, (BATCH,), 0, VOCAB_SIZE, jnp.int32)
    context_word = jax.random.randint(k_cw, (BATCH,), 0, VOCAB_SIZE, jnp.int32)

    # Pure-JAX reference of the forward semantics.
    ref = jax.nn.sigmoid(
        jnp.sum(target_embeddings[target_word] * context_embeddings[context_word],
                axis=1))

    # Path A: VMEM-resident tables + one-hot MXU gather.
    out_resident = jax.block_until_ready(
        word2vec_forward(target_embeddings, context_embeddings,
                         target_word, context_word))
    assert out_resident.shape == (BATCH,) and out_resident.dtype == jnp.float32
    assert jnp.allclose(out_resident, ref, atol=1e-5, rtol=1e-5), (out_resident, ref)

    # Path B: tables in HBM, per-row DMA gather (large-vocabulary fallback).
    out_hbm = jax.block_until_ready(
        word2vec_forward(target_embeddings, context_embeddings,
                         target_word, context_word, force_hbm_gather=True))
    assert out_hbm.shape == (BATCH,) and out_hbm.dtype == jnp.float32
    assert jnp.allclose(out_hbm, ref, atol=1e-5, rtol=1e-5), (out_hbm, ref)

    print("KERNEL_OK")
</pallas_src>

<mosaic_0001>
module attributes {stable_mosaic.version = 11 : i64} {
  func.func @_w2v_resident_kernel(%arg0: memref<8x1xi32, #tpu.memory_space<vmem>>, %arg1: memref<8x1xi32, #tpu.memory_space<vmem>>, %arg2: memref<64x128xf32, #tpu.memory_space<vmem>>, %arg3: memref<64x128xf32, #tpu.memory_space<vmem>>, %arg4: memref<8x128xf32, #tpu.memory_space<vmem>>) attributes {dimension_semantics = [], scalar_prefetch = 0 : i64, scratch_operands = 0 : i64, tpu.core_type = #tpu.core_type<tc>} {
    %0 = tpu.iota {dimensions = array<i32: 1>} : vector<8x64xi32>
    %c0 = arith.constant 0 : index
    %c0_0 = arith.constant 0 : index
    %1 = vector.load %arg0[%c0, %c0_0] : memref<8x1xi32, #tpu.memory_space<vmem>>, vector<8x1xi32>
    %2 = vector.broadcast %1 : vector<8x1xi32> to vector<8x64xi32>
    %3 = arith.cmpi eq, %0, %2 : vector<8x64xi32>
    %4 = arith.extui %3 : vector<8x64xi1> to vector<8x64xi32>
    %5 = arith.sitofp %4 : vector<8x64xi32> to vector<8x64xf32>
    %c0_1 = arith.constant 0 : index
    %c0_2 = arith.constant 0 : index
    %6 = vector.load %arg1[%c0_1, %c0_2] : memref<8x1xi32, #tpu.memory_space<vmem>>, vector<8x1xi32>
    %7 = vector.broadcast %6 : vector<8x1xi32> to vector<8x64xi32>
    %8 = arith.cmpi eq, %0, %7 : vector<8x64xi32>
    %9 = arith.extui %8 : vector<8x64xi1> to vector<8x64xi32>
    %10 = arith.sitofp %9 : vector<8x64xi32> to vector<8x64xf32>
    %c0_3 = arith.constant 0 : index
    %c0_4 = arith.constant 0 : index
    %11 = vector.load %arg2[%c0_3, %c0_4] : memref<64x128xf32, #tpu.memory_space<vmem>>, vector<64x128xf32>
    %cst = arith.constant dense<0.000000e+00> : vector<8x128xf32>
    %12 = tpu.matmul %5, %11, %cst {dimension_numbers = #tpu.dot_dimension_numbers<[1], [0], [0], [1], [0, 0, 1, 1], [], []>} : vector<8x64xf32>, vector<64x128xf32>, vector<8x128xf32> -> vector<8x128xf32>
    %c0_5 = arith.constant 0 : index
    %c0_6 = arith.constant 0 : index
    %13 = vector.load %arg3[%c0_5, %c0_6] : memref<64x128xf32, #tpu.memory_space<vmem>>, vector<64x128xf32>
    %cst_7 = arith.constant dense<0.000000e+00> : vector<8x128xf32>
    %14 = tpu.matmul %10, %13, %cst_7 {dimension_numbers = #tpu.dot_dimension_numbers<[1], [0], [0], [1], [0, 0, 1, 1], [], []>} : vector<8x64xf32>, vector<64x128xf32>, vector<8x128xf32> -> vector<8x128xf32>
    %15 = arith.mulf %12, %14 : vector<8x128xf32>
    %cst_8 = arith.constant dense<0.000000e+00> : vector<8xf32>
    %16 = vector.multi_reduction <add>, %15, %cst_8 [1] : vector<8x128xf32> to vector<8xf32>
    %17 = vector.shape_cast %16 : vector<8xf32> to vector<8x1xf32>
    %18 = arith.negf %17 : vector<8x1xf32>
    %19 = math.exp %18 : vector<8x1xf32>
    %cst_9 = arith.constant 1.000000e+00 : f32
    %20 = vector.broadcast %cst_9 : f32 to vector<8x1xf32>
    %21 = arith.addf %20, %19 : vector<8x1xf32>
    %22 = arith.divf %20, %21 : vector<8x1xf32>
    %23 = vector.shape_cast %22 : vector<8x1xf32> to vector<8x1xf32>
    %24 = vector.broadcast %23 : vector<8x1xf32> to vector<8x128xf32>
    %c0_10 = arith.constant 0 : index
    %c0_11 = arith.constant 0 : index
    %25 = vector.load %arg4[%c0_10, %c0_11] : memref<8x128xf32, #tpu.memory_space<vmem>>, vector<8x128xf32>
    tpu.vector_store %arg4[%c0_10, %c0_11], %24 {strides = array<i32>} : memref<8x128xf32, #tpu.memory_space<vmem>>, vector<8x128xf32>,
    return
  }
}

</mosaic_0001>

<llo_original>
// kernel: tpu_custom_call.1
$region0: #{tpu_custom_call.1}
  #allocation0 [shape = 'u32[]', space=smem, size = 0x4, offset = 0x4, fixed_abs, tag = 'smem constant byte address 0x4 - core index']
  #allocation1 [shape = 'u32[144,128]{1,0:T(1,128)}', space=vmem, size = 0x12000, scoped, tag = 'internal scratch']
  %s0 = inlined_call_operand.vmem [shape: s32[8,1], index: 0, kind: input, shape index: {}]
  %s1 = inlined_call_operand.vmem [shape: s32[8,1], index: 1, kind: input, shape index: {}]
  %s2 = inlined_call_operand.hbm [shape: f32[64,128], index: 2, kind: input, shape index: {}]
  %s3 = inlined_call_operand.hbm [shape: f32[64,128], index: 3, kind: input, shape index: {}]
  %s4 = inlined_call_operand.hbm [shape: f32[8,128], index: 4, kind: output, shape index: {}]
  %s5 = sld [smem:[#allocation0]]
  $region34: #{tpu_custom_call.1} parent=0
    _
  %s7 = ssub.s32 1, %s5
  %s8 = scalar_select 0, %s7, %s5
  $region1: #{tpu_custom_call.1} parent=0
    #allocation2 [shape = 'u8[32768]{0}', space=vmem, size = 0x8000, scoped, tag = 'input window, operand 2, single buffered']
    #allocation3 [shape = 's32[1]{0}', space=sflag, size = 0x4, scoped, tag = 'scoped memory for tpu_custom_call.1']
    #allocation4 [shape = 's32[1]{0}', space=sflag, size = 0x4, scoped, tag = 'scoped memory for tpu_custom_call.1']
    #allocation5 [shape = 'u8[32768]{0}', space=vmem, size = 0x8000, scoped, tag = 'input window, operand 3, single buffered']
    #allocation6 [shape = 's32[1]{0}', space=sflag, size = 0x4, scoped, tag = 'scoped memory for tpu_custom_call.1']
    #allocation7 [shape = 'u8[4096]{0}', space=vmem, size = 0x1000, scoped, tag = 'output window, operand 0, single buffered']
    %9 = vsyncpa [#allocation3], 0
    %10 = vsyncpa [#allocation6], 0
    %11 = vsyncpa [#allocation4], 0
    // Predicated region
    $region2: #{tpu_custom_call.1} parent=1 // pred_check
      _
    $region3: #{tpu_custom_call.1} parent=1 // pred_check_branch
      %13 = sbr.rel (0) target = $region5
    $region4: #{tpu_custom_call.1} parent=1 // pred_region
      _
    $region5: #{tpu_custom_call.1} parent=1 // pred_fallthru
      _
    // Predicated region
    $region6: #{tpu_custom_call.1} parent=1 // pred_check
      _
    $region7: #{tpu_custom_call.1} parent=1 // pred_check_branch
      %15 = sbr.rel (0) target = $region9
    $region8: #{tpu_custom_call.1} parent=1 // pred_region
      _
    $region9: #{tpu_custom_call.1} parent=1 // pred_fallthru
      _
    // Predicated region
    $region10: #{tpu_custom_call.1} parent=1 // pred_check
      _
    $region11: #{tpu_custom_call.1} parent=1 // pred_check_branch
      %17 = sbr.rel (0) target = $region13
    $region12: #{tpu_custom_call.1} parent=1 // pred_region
      %s19 = ssub.s32 1024, 1024
      %20 = vsyncadd [#allocation3], %s19
      %s21 = sshll.u32 [#allocation2], 4
      %s22 = int_to_ptr.vmem [resolvable:$true] %s21
      %27 = dma.hbm_to_vmem [thread:$0]  %s2, 1024, %s22, [#allocation3], 128, 128, 8
    $region13: #{tpu_custom_call.1} parent=1 // pred_fallthru
      _
    // Predicated region
    $region14: #{tpu_custom_call.1} parent=1 // pred_check
      _
    $region15: #{tpu_custom_call.1} parent=1 // pred_check_branch
      %29 = sbr.rel (0) target = $region17
    $region16: #{tpu_custom_call.1} parent=1 // pred_region
      %s31 = ssub.s32 1024, 1024
      %32 = vsyncadd [#allocation6], %s31
      %s33 = sshll.u32 [#allocation5], 4
      %s34 = int_to_ptr.vmem [resolvable:$true] %s33
      %39 = dma.hbm_to_vmem [thread:$0]  %s3, 1024, %s34, [#allocation6], 128, 128, 8
    $region17: #{tpu_custom_call.1} parent=1 // pred_fallthru
      _
    // Predicated region
    $region18: #{tpu_custom_call.1} parent=1 // pred_check
      _
    $region19: #{tpu_custom_call.1} parent=1 // pred_check_branch
      %41 = sbr.rel (0) target = $region21
    $region20: #{tpu_custom_call.1} parent=1 // pred_region
      %42 = dma.done [#allocation3], 1024
    $region21: #{tpu_custom_call.1} parent=1 // pred_fallthru
      _
    // Predicated region
    $region22: #{tpu_custom_call.1} parent=1 // pred_check
      _
    $region23: #{tpu_custom_call.1} parent=1 // pred_check_branch
      %44 = sbr.rel (0) target = $region25
    $region24: #{tpu_custom_call.1} parent=1 // pred_region
      %45 = dma.done [#allocation6], 1024
    $region25: #{tpu_custom_call.1} parent=1 // pred_fallthru
      _
    %v46 = vlaneseq
    %v47 = vand.u32 %v46, 127
    %v48 = vld [vmem:[%s0] sm:$0xff]
    %49 = vset.pattern.permute.xlu0 0
    %50 = vperm.xlu0 %49, %v48
    %v51 = vpop.permute.xlu0 %50
    %vm52 = vcmp.eq.s32.totalorder %v47, %v51
    %v53 = vsel %vm52, 1, 0
    %v54 = vcvt.s32.f32 %v53
    %v55 = vld [vmem:[%s1] sm:$0xff]
    %56 = vset.pattern.permute.xlu0 0
    %57 = vperm.xlu0 %56, %v55
    %v58 = vpop.permute.xlu0 %57
    %vm59 = vcmp.eq.s32.totalorder %v47, %v58
    %v60 = vsel %vm59, 1, 0
    %v61 = vcvt.s32.f32 %v60
    %v62 = vld [vmem:[#allocation2] sm:$0xff]
    %v63 = vld [vmem:[#allocation2 + $0x8] sm:$0xff]
    %v64 = vld [vmem:[#allocation2 + $0x10] sm:$0xff]
    %v65 = vld [vmem:[#allocation2 + $0x18] sm:$0xff]
    %v66 = vld [vmem:[#allocation2 + $0x20] sm:$0xff]
    %v67 = vld [vmem:[#allocation2 + $0x28] sm:$0xff]
    %v68 = vld [vmem:[#allocation2 + $0x30] sm:$0xff]
    %v69 = vld [vmem:[#allocation2 + $0x38] sm:$0xff]
    %vm70 = vcmask 523264
    %v72 = vsel %vm70, %v54, 0
    %74 = vmatprep.subr.mxu0 0.0
    %75 = vmatpush1.msra.mxu0 %v62
    %76 = vmatprep.subr.mxu0 0.0
    %77 = vmatpush1.msra.mxu0 %v63
    %78 = vmatprep.subr.mxu0 0.0
    %79 = vmatpush1.msra.mxu0 %v64
    %80 = vmatprep.subr.mxu0 0.0
    %81 = vmatpush1.msra.mxu0 %v65
    %82 = vmatprep.subr.mxu0 0.0
    %83 = vmatpush1.msra.mxu0 %v66
    %84 = vmatprep.subr.mxu0 0.0
    %85 = vmatpush1.msra.mxu0 %v67
    %86 = vmatprep.subr.mxu0 0.0
    %87 = vmatpush1.msra.mxu0 %v68
    %88 = vmatprep.subr.mxu0 0.0
    %89 = vmatpush1.msra.mxu0 %v69
    %90 = vmatprep.subr.mxu0 0.0
    %91 = vmatpush1.msra.mxu0 0.0
    %92 = vmatprep.subr.mxu0 0.0
    %93 = vmatpush1.msra.mxu0 0.0
    %94 = vmatprep.subr.mxu0 0.0
    %95 = vmatpush1.msra.mxu0 0.0
    %96 = vmatprep.subr.mxu0 0.0
    %97 = vmatpush1.msra.mxu0 0.0
    %98 = vmatprep.subr.mxu0 0.0
    %99 = vmatpush1.msra.mxu0 0.0
    %100 = vmatprep.subr.mxu0 0.0
    %101 = vmatpush1.msra.mxu0 0.0
    %102 = vmatprep.subr.mxu0 0.0
    %103 = vmatpush1.msra.mxu0 0.0
    %104 = vmatprep.subr.mxu0 0.0
    %105 = vmatpush1.msra.mxu0 0.0
    %106 = vmatprep.subr.mxu0 0.0
    %107 = vmatpush1.msra.mxu0 0.0
    %108 = vmatprep.subr.mxu0 0.0
    %109 = vmatpush1.msra.mxu0 0.0
    %110 = vmatprep.subr.mxu0 0.0
    %111 = vmatpush1.msra.mxu0 0.0
    %112 = vmatprep.subr.mxu0 0.0
    %113 = vmatpush1.msra.mxu0 0.0
    %114 = vmatprep.subr.mxu0 0.0
    %115 = vmatpush1.msra.mxu0 0.0
    %116 = vmatprep.subr.mxu0 0.0
    %117 = vmatpush1.msra.mxu0 0.0
    %118 = vmatprep.subr.mxu0 0.0
    %119 = vmatpush1.msra.mxu0 0.0
    %120 = vmatprep.subr.mxu0 0.0
    %121 = vmatpush1.msra.mxu0 0.0
    %122 = vmatprep.subr.mxu0 0.0
    %123 = vmatpush1.msra.mxu0 0.0
    %124 = vmatprep.subr.mxu0 0.0
    %125 = vmatpush1.msra.mxu0 0.0
    %126 = vmatprep.subr.mxu0 0.0
    %127 = vmatpush1.msra.mxu0 0.0
    %128 = vmatprep.subr.mxu0 0.0
    %129 = vmatpush1.msra.mxu0 0.0
    %130 = vmatprep.subr.mxu0 0.0
    %131 = vmatpush1.msra.mxu0 0.0
    %132 = vmatprep.subr.mxu0 0.0
    %133 = vmatpush1.msra.mxu0 0.0
    %134 = vmatprep.subr.mxu0 0.0
    %135 = vmatpush1.msra.mxu0 0.0
    %136 = vmatprep.subr.mxu0 0.0
    %137 = vmatpush1.msra.mxu0 0.0
    %138 = vmatprep.mubr.f32.mxu0 0.0
    %139 = vmatmul.mubr.f32.gmra.mrb[0].mxu0 %v72
    %v140 = vpop.f32.mrb[0].mxu0
    %v141 = vadd.f32 0.0, %v140
    %v142 = vpop.f32.mrb[0].mxu0
    %143 = vdwg.mxu0
    %v144 = vld [vmem:[#allocation5] sm:$0xff]
    %v145 = vld [vmem:[#allocation5 + $0x8] sm:$0xff]
    %v146 = vld [vmem:[#allocation5 + $0x10] sm:$0xff]
    %v147 = vld [vmem:[#allocation5 + $0x18] sm:$0xff]
    %v148 = vld [vmem:[#allocation5 + $0x20] sm:$0xff]
    %v149 = vld [vmem:[#allocation5 + $0x28] sm:$0xff]
    %v150 = vld [vmem:[#allocation5 + $0x30] sm:$0xff]
    %v151 = vld [vmem:[#allocation5 + $0x38] sm:$0xff]
    %v153 = vsel %vm70, %v61, 0
    %155 = vmatprep.subr.mxu0 0.0
    %156 = vmatpush1.msra.mxu0 %v144
    %157 = vmatprep.subr.mxu0 0.0
    %158 = vmatpush1.msra.mxu0 %v145
    %159 = vmatprep.subr.mxu0 0.0
    %160 = vmatpush1.msra.mxu0 %v146
    %161 = vmatprep.subr.mxu0 0.0
    %162 = vmatpush1.msra.mxu0 %v147
    %163 = vmatprep.subr.mxu0 0.0
    %164 = vmatpush1.msra.mxu0 %v148
    %165 = vmatprep.subr.mxu0 0.0
    %166 = vmatpush1.msra.mxu0 %v149
    %167 = vmatprep.subr.mxu0 0.0
    %168 = vmatpush1.msra.mxu0 %v150
    %169 = vmatprep.subr.mxu0 0.0
    %170 = vmatpush1.msra.mxu0 %v151
    %171 = vmatprep.subr.mxu0 0.0
    %172 = vmatpush1.msra.mxu0 0.0
    %173 = vmatprep.subr.mxu0 0.0
    %174 = vmatpush1.msra.mxu0 0.0
    %175 = vmatprep.subr.mxu0 0.0
    %176 = vmatpush1.msra.mxu0 0.0
    %177 = vmatprep.subr.mxu0 0.0
    %178 = vmatpush1.msra.mxu0 0.0
    %179 = vmatprep.subr.mxu0 0.0
    %180 = vmatpush1.msra.mxu0 0.0
    %181 = vmatprep.subr.mxu0 0.0
    %182 = vmatpush1.msra.mxu0 0.0
    %183 = vmatprep.subr.mxu0 0.0
    %184 = vmatpush1.msra.mxu0 0.0
    %185 = vmatprep.subr.mxu0 0.0
    %186 = vmatpush1.msra.mxu0 0.0
    %187 = vmatprep.subr.mxu0 0.0
    %188 = vmatpush1.msra.mxu0 0.0
    %189 = vmatprep.subr.mxu0 0.0
    %190 = vmatpush1.msra.mxu0 0.0
    %191 = vmatprep.subr.mxu0 0.0
    %192 = vmatpush1.msra.mxu0 0.0
    %193 = vmatprep.subr.mxu0 0.0
    %194 = vmatpush1.msra.mxu0 0.0
    %195 = vmatprep.subr.mxu0 0.0
    %196 = vmatpush1.msra.mxu0 0.0
    %197 = vmatprep.subr.mxu0 0.0
    %198 = vmatpush1.msra.mxu0 0.0
    %199 = vmatprep.subr.mxu0 0.0
    %200 = vmatpush1.msra.mxu0 0.0
    %201 = vmatprep.subr.mxu0 0.0
    %202 = vmatpush1.msra.mxu0 0.0
    %203 = vmatprep.subr.mxu0 0.0
    %204 = vmatpush1.msra.mxu0 0.0
    %205 = vmatprep.subr.mxu0 0.0
    %206 = vmatpush1.msra.mxu0 0.0
    %207 = vmatprep.subr.mxu0 0.0
    %208 = vmatpush1.msra.mxu0 0.0
    %209 = vmatprep.subr.mxu0 0.0
    %210 = vmatpush1.msra.mxu0 0.0
    %211 = vmatprep.subr.mxu0 0.0
    %212 = vmatpush1.msra.mxu0 0.0
    %213 = vmatprep.subr.mxu0 0.0
    %214 = vmatpush1.msra.mxu0 0.0
    %215 = vmatprep.subr.mxu0 0.0
    %216 = vmatpush1.msra.mxu0 0.0
    %217 = vmatprep.subr.mxu0 0.0
    %218 = vmatpush1.msra.mxu0 0.0
    %219 = vmatprep.mubr.f32.mxu0 0.0
    %220 = vmatmul.mubr.f32.gmra.mrb[0].mxu0 %v153
    %v221 = vpop.f32.mrb[0].mxu0
    %v222 = vadd.f32 0.0, %v221
    %v223 = vpop.f32.mrb[0].mxu0
    %224 = vdwg.mxu0
    %v225 = vmul.f32 %v141, %v222
    %226 = vadd.xlane.f32.xlu0 %v225
    %v227 = vpop.xlane.xlu0 %226
    %v228 = vxor.u32 %v227, 2147483648
    %v229 = vmul.f32 %v228, 1.442695
    %v230 = vpow.pop %v229
    %v231 = vadd.f32 %v230, 1.0
    %v232 = vrcp.pop %v231
    %v233 = vmul.f32 1.0, %v232
    %234 = vst [vmem:[#allocation7] sm:$0xff] %v233
    // Predicated region
    $region26: #{tpu_custom_call.1} parent=1 // pred_check
      _
    $region27: #{tpu_custom_call.1} parent=1 // pred_check_branch
      %236 = sbr.rel (0) target = $region29
    $region28: #{tpu_custom_call.1} parent=1 // pred_region
      %s238 = ssub.s32 128, 128
      %239 = vsyncadd [#allocation4], %s238
      %s241 = sshll.u32 [#allocation7], 4
      %s242 = int_to_ptr.vmem [resolvable:$true] %s241
      %244 = dma.vmem_to_hbm [thread:$0]  %s242, 128, %s4, [#allocation4]
    $region29: #{tpu_custom_call.1} parent=1 // pred_fallthru
      _
    // Predicated region
    $region30: #{tpu_custom_call.1} parent=1 // pred_check
      _
    $region31: #{tpu_custom_call.1} parent=1 // pred_check_branch
      %246 = sbr.rel (0) target = $region33
    $region32: #{tpu_custom_call.1} parent=1 // pred_region
      %247 = dma.done [#allocation4], 128
    $region33: #{tpu_custom_call.1} parent=1 // pred_fallthru
      _
    %248 = vsyncpa [#allocation3], 1
    %249 = vsyncpa [#allocation6], 1
    %250 = vsyncpa [#allocation4], 1

</llo_original>
